<compile_context>
chip_gen: v6e
topology: v6e:2x2x1
jax: 0.10.0
libtpu: 0.0.40
codegen_flags: <defaults>
</compile_context>

<pallas_src>
import functools

import jax
import jax.numpy as jnp
from jax.experimental import pallas as pl
from jax.experimental.pallas import tpu as pltpu


def _round_up(x: int, m: int) -> int:
    return (x + m - 1) // m * m


def _actor_kernel(x_ref, w_ref, b_ref, o_ref, *, ns_pad, hp, n_action, action_max):
    # x_ref: (bb, ns_pad)        bf16 state tile (batch on sublanes, feats on lanes)
    # w_ref: (ns_pad + 2*hp, hp) bf16 packed [w1; w2; w3], zero-padded, VMEM-resident
    # b_ref: (3, hp)             f32 packed [b1; b2; b3], zero-padded
    # o_ref: (bb, n_action)      f32 narrow output (tiny writeback, masked vst)
    x = x_ref[...]
    w1 = w_ref[pl.ds(0, ns_pad), :]            # (ns_pad, hp)
    w2 = w_ref[pl.ds(ns_pad, hp), :]           # (hp, hp)
    w3 = w_ref[pl.ds(ns_pad + hp, hp), :]      # (hp, hp)
    b1 = b_ref[0:1, :]
    b2 = b_ref[1:2, :]
    b3 = b_ref[2:3, 0:n_action]

    # bf16 operands on the MXU, f32 accumulation; elementwise math stays f32.
    h1 = jnp.maximum(jnp.dot(x, w1, preferred_element_type=jnp.float32) + b1, 0.0)
    h2 = jnp.maximum(
        jnp.dot(h1.astype(jnp.bfloat16), w2, preferred_element_type=jnp.float32) + b2,
        0.0)
    h3 = jnp.dot(h2.astype(jnp.bfloat16), w3, preferred_element_type=jnp.float32)
    a = jnp.tanh(h3[:, :n_action] + b3) * action_max
    o_ref[...] = a.astype(o_ref.dtype)


def pack_actor_params(params, *, lane_pad=128):
    """One-time packing of Actor params into padded bf16/f32 slabs.

    Do this once per parameter update and reuse across forward calls; it keeps
    the pad/scatter/cast work out of the steady-state call path.
    """
    w1 = jnp.asarray(params["w1"], jnp.float32)   # (n_state, H)
    w2 = jnp.asarray(params["w2"], jnp.float32)   # (H, H)
    w3 = jnp.asarray(params["w3"], jnp.float32)   # (H, n_action)
    n_state, H = w1.shape
    n_action = w3.shape[1]

    HP = _round_up(max(H, n_action), lane_pad)    # lane (last-dim) padding
    NS = _round_up(n_state, 8)                    # sublane padding

    w_slab = jnp.zeros((NS + 2 * HP, HP), jnp.float32)
    w_slab = w_slab.at[:n_state, :H].set(w1)
    w_slab = w_slab.at[NS:NS + H, :H].set(w2)
    w_slab = w_slab.at[NS + HP:NS + HP + H, :n_action].set(w3)

    b_slab = jnp.zeros((3, HP), jnp.float32)
    b_slab = b_slab.at[0, :H].set(jnp.asarray(params["b1"], jnp.float32).reshape(-1))
    b_slab = b_slab.at[1, :H].set(jnp.asarray(params["b2"], jnp.float32).reshape(-1))
    b_slab = b_slab.at[2, :n_action].set(jnp.asarray(params["b3"], jnp.float32).reshape(-1))

    return {
        "w_slab": w_slab.astype(jnp.bfloat16),   # bf16 MXU operands
        "b_slab": b_slab,                        # biases stay f32
        "n_state": n_state,
        "n_hidden": H,
        "n_action": n_action,
        "ns_pad": NS,
        "hp": HP,
    }


def _choose_batch_tile(B: int, block_b: int):
    bb = min(_round_up(B, 8), block_b)
    # v7x has 2 TensorCores per chip: keep >= 2 grid steps for large batches so
    # the "parallel" batch axis actually has work to shard across both cores.
    if B >= 512 and _round_up(B, bb) // bb < 2:
        bb = _round_up((B + 1) // 2, 8)
    return bb, _round_up(B, bb)


def actor_forward(state, packed, action_max=1.0, *, block_b=2048):
    """Pallas implementation of Actor.forward.

    state:  (B, n_state) or (n_state,) float32
    packed: output of pack_actor_params(params)
    """
    if state.ndim == 1:
        state = state[None, :]
    B, n_state = state.shape
    assert n_state == packed["n_state"], "state feature dim mismatch"
    NS, HP = packed["ns_pad"], packed["hp"]
    n_action = packed["n_action"]

    bb, B_pad = _choose_batch_tile(B, block_b)

    x = state.astype(jnp.bfloat16)
    if B_pad != B or NS != n_state:
        x_pad = jnp.zeros((B_pad, NS), jnp.bfloat16)
        x_pad = x_pad.at[:B, :n_state].set(x)
    else:
        x_pad = x  # already aligned: skip the extra pad/copy

    kernel = functools.partial(
        _actor_kernel, ns_pad=NS, hp=HP, n_action=n_action,
        action_max=float(action_max))
    w_rows = NS + 2 * HP

    def run(single_buffer_weights):
        extra = {}
        if single_buffer_weights:
            # Constant index map -> DMA'd once; no point double-buffering.
            extra = dict(pipeline_mode=pl.Buffered(1))
        return pl.pallas_call(
            kernel,
            out_shape=jax.ShapeDtypeStruct((B_pad, n_action), jnp.float32),
            grid=(B_pad // bb,),
            in_specs=[
                # state: tiled over the batch grid axis
                pl.BlockSpec((bb, NS), lambda i: (i, 0)),
                # packed weights / biases: constant block index -> VMEM-resident
                pl.BlockSpec((w_rows, HP), lambda i: (0, 0), **extra),
                pl.BlockSpec((3, HP), lambda i: (0, 0), **extra),
            ],
            out_specs=pl.BlockSpec((bb, n_action), lambda i: (i, 0)),
            compiler_params=pltpu.CompilerParams(
                dimension_semantics=("parallel",)),
        )(x_pad, packed["w_slab"], packed["b_slab"])

    try:
        out = run(hasattr(pl, "Buffered"))
    except Exception:  # fall back if this JAX rejects single-buffered operands
        out = run(False)

    return out if B_pad == B else out[:B]


def init_actor_params(key, n_state, n_action, n_hidden=64):
    """Deterministic init mimicking PyTorch nn.Linear default:
    U(-1/sqrt(fan_in), 1/sqrt(fan_in)) for both weight and bias."""
    ks = jax.random.split(key, 6)

    def linear(kw, kb, fan_in, fan_out):
        bound = 1.0 / jnp.sqrt(float(fan_in))
        w = jax.random.uniform(kw, (fan_in, fan_out), jnp.float32, -bound, bound)
        b = jax.random.uniform(kb, (1, fan_out), jnp.float32, -bound, bound)
        return w, b

    w1, b1 = linear(ks[0], ks[1], n_state, n_hidden)
    w2, b2 = linear(ks[2], ks[3], n_hidden, n_hidden)
    w3, b3 = linear(ks[4], ks[5], n_hidden, n_action)
    return {"w1": w1, "b1": b1, "w2": w2, "b2": b2, "w3": w3, "b3": b3}


def actor_forward_ref(state, params, action_max=1.0, *, matmul_dtype=jnp.float32):
    """Pure-JAX reference. matmul_dtype=bf16 mirrors the kernel's MXU precision."""
    if state.ndim == 1:
        state = state[None, :]

    def mm(a, w):
        return jnp.dot(a.astype(matmul_dtype), jnp.asarray(w).astype(matmul_dtype),
                       preferred_element_type=jnp.float32)

    h1 = jnp.maximum(mm(state, params["w1"]) + params["b1"].reshape(1, -1), 0.0)
    h2 = jnp.maximum(mm(h1, params["w2"]) + params["b2"].reshape(1, -1), 0.0)
    h3 = mm(h2, params["w3"]) + params["b3"].reshape(1, -1)
    return jnp.tanh(h3) * action_max


if __name__ == "__main__":
    key = jax.random.PRNGKey(0)
    k_params, k_state = jax.random.split(key)

    n_state, n_action, n_hidden = 16, 8, 64
    batch = 8
    action_max = 2.0

    params = init_actor_params(k_params, n_state, n_action, n_hidden)
    packed = pack_actor_params(params)   # one-time packing, hoisted out of the call path
    state = jax.random.normal(k_state, (batch, n_state), jnp.float32)

    # Small batch (single grid step).
    out = jax.block_until_ready(actor_forward(state, packed, action_max))
    ref_bf16 = actor_forward_ref(state, params, action_max, matmul_dtype=jnp.bfloat16)
    ref_f32 = actor_forward_ref(state, params, action_max)
    assert out.shape == (batch, n_action)
    assert jnp.allclose(out, ref_bf16, atol=5e-3, rtol=5e-3), "mismatch vs bf16 reference"
    assert jnp.allclose(out, ref_f32, atol=6e-2, rtol=6e-2), "mismatch vs f32 reference"

    # 1-D state path (module unsqueezes).
    out1 = jax.block_until_ready(actor_forward(state[0], packed, action_max))
    assert out1.shape == (1, n_action)
    assert jnp.allclose(out1, ref_bf16[:1], atol=5e-3, rtol=5e-3), "mismatch (1-D state)"

    # Larger, non-block-aligned batch: exercises the padded, multi-grid-step
    # path (>= 2 "parallel" steps so both v7x TensorCores get work).
    state_big = jax.random.normal(jax.random.PRNGKey(1), (1000, n_state), jnp.float32)
    out_big = jax.block_until_ready(actor_forward(state_big, packed, action_max))
    ref_big = actor_forward_ref(state_big, params, action_max, matmul_dtype=jnp.bfloat16)
    assert out_big.shape == (1000, n_action)
    assert jnp.allclose(out_big, ref_big, atol=5e-3, rtol=5e-3), "mismatch (big batch)"

    print("KERNEL_OK")
</pallas_src>

<mosaic_0001>
module attributes {stable_mosaic.version = 11 : i64} {
  func.func @_actor_kernel(%arg0: i32, %arg1: memref<8x16xbf16, #tpu.memory_space<vmem>>, %arg2: memref<272x128xbf16, #tpu.memory_space<vmem>>, %arg3: memref<3x128xf32, #tpu.memory_space<vmem>>, %arg4: memref<8x8xf32, #tpu.memory_space<vmem>>) attributes {dimension_semantics = [#tpu.dimension_semantics<parallel>], iteration_bounds = array<i64: 1>, scalar_prefetch = 0 : i64, scratch_operands = 0 : i64, tpu.core_type = #tpu.core_type<tc>, window_params = [{transform_indices = @transform_0, window_bounds = array<i64: 8, 16>}, {pipeline_mode = #tpu.pipeline_mode<synchronous>, transform_indices = @transform_1, window_bounds = array<i64: 272, 128>}, {pipeline_mode = #tpu.pipeline_mode<synchronous>, transform_indices = @transform_2, window_bounds = array<i64: 3, 128>}, {transform_indices = @transform_3, window_bounds = array<i64: 8, 8>}]} {
    %c0 = arith.constant 0 : index
    %c0_0 = arith.constant 0 : index
    %0 = vector.load %arg1[%c0, %c0_0] : memref<8x16xbf16, #tpu.memory_space<vmem>>, vector<8x16xbf16>
    %c0_1 = arith.constant 0 : index
    %c0_2 = arith.constant 0 : index
    %1 = vector.load %arg2[%c0_1, %c0_2] : memref<272x128xbf16, #tpu.memory_space<vmem>>, vector<16x128xbf16>
    %c16 = arith.constant 16 : index
    %c0_3 = arith.constant 0 : index
    %2 = vector.load %arg2[%c16, %c0_3] : memref<272x128xbf16, #tpu.memory_space<vmem>>, vector<128x128xbf16>
    %c144 = arith.constant 144 : index
    %c0_4 = arith.constant 0 : index
    %3 = vector.load %arg2[%c144, %c0_4] : memref<272x128xbf16, #tpu.memory_space<vmem>>, vector<128x128xbf16>
    %c0_5 = arith.constant 0 : index
    %c0_6 = arith.constant 0 : index
    %4 = vector.load %arg3[%c0_5, %c0_6] : memref<3x128xf32, #tpu.memory_space<vmem>>, vector<1x128xf32>
    %c1 = arith.constant 1 : index
    %c0_7 = arith.constant 0 : index
    %5 = vector.load %arg3[%c1, %c0_7] : memref<3x128xf32, #tpu.memory_space<vmem>>, vector<1x128xf32>
    %c2 = arith.constant 2 : index
    %c0_8 = arith.constant 0 : index
    %6 = vector.load %arg3[%c2, %c0_8] : memref<3x128xf32, #tpu.memory_space<vmem>>, vector<1x8xf32>
    %cst = arith.constant dense<0.000000e+00> : vector<8x128xf32>
    %7 = tpu.matmul %0, %1, %cst {dimension_numbers = #tpu.dot_dimension_numbers<[1], [0], [0], [1], [0, 0, 1, 1], [], []>} : vector<8x16xbf16>, vector<16x128xbf16>, vector<8x128xf32> -> vector<8x128xf32>
    %8 = vector.broadcast %4 : vector<1x128xf32> to vector<8x128xf32>
    %9 = arith.addf %7, %8 : vector<8x128xf32>
    %cst_9 = arith.constant 0.000000e+00 : f32
    %10 = vector.broadcast %cst_9 : f32 to vector<8x128xf32>
    %11 = arith.maximumf %9, %10 : vector<8x128xf32>
    %12 = arith.truncf %11 : vector<8x128xf32> to vector<8x128xbf16>
    %cst_10 = arith.constant dense<0.000000e+00> : vector<8x128xf32>
    %13 = tpu.matmul %12, %2, %cst_10 {dimension_numbers = #tpu.dot_dimension_numbers<[1], [0], [0], [1], [0, 0, 1, 1], [], []>} : vector<8x128xbf16>, vector<128x128xbf16>, vector<8x128xf32> -> vector<8x128xf32>
    %14 = vector.broadcast %5 : vector<1x128xf32> to vector<8x128xf32>
    %15 = arith.addf %13, %14 : vector<8x128xf32>
    %cst_11 = arith.constant 0.000000e+00 : f32
    %16 = vector.broadcast %cst_11 : f32 to vector<8x128xf32>
    %17 = arith.maximumf %15, %16 : vector<8x128xf32>
    %18 = arith.truncf %17 : vector<8x128xf32> to vector<8x128xbf16>
    %cst_12 = arith.constant dense<0.000000e+00> : vector<8x128xf32>
    %19 = tpu.matmul %18, %3, %cst_12 {dimension_numbers = #tpu.dot_dimension_numbers<[1], [0], [0], [1], [0, 0, 1, 1], [], []>} : vector<8x128xbf16>, vector<128x128xbf16>, vector<8x128xf32> -> vector<8x128xf32>
    %20 = vector.extract_strided_slice %19 {offsets = [0, 0], sizes = [8, 8], strides = [1, 1]} : vector<8x128xf32> to vector<8x8xf32>
    %21 = vector.broadcast %6 : vector<1x8xf32> to vector<8x8xf32>
    %22 = arith.addf %20, %21 : vector<8x8xf32>
    %23 = math.tanh %22 : vector<8x8xf32>
    %cst_13 = arith.constant 2.000000e+00 : f32
    %24 = vector.broadcast %cst_13 : f32 to vector<8x8xf32>
    %25 = arith.mulf %23, %24 : vector<8x8xf32>
    %c0_14 = arith.constant 0 : index
    %c0_15 = arith.constant 0 : index
    %26 = vector.load %arg4[%c0_14, %c0_15] : memref<8x8xf32, #tpu.memory_space<vmem>>, vector<8x8xf32>
    tpu.vector_store %arg4[%c0_14, %c0_15], %25 {strides = array<i32>} : memref<8x8xf32, #tpu.memory_space<vmem>>, vector<8x8xf32>,
    return
  }
  func.func @transform_0(%arg0: i32) -> (i32, i32) {
    %c0_i32 = arith.constant 0 : i32
    %c0_i32_0 = arith.constant 0 : i32
    return %arg0, %c0_i32 : i32, i32
  }
  func.func @transform_1(%arg0: i32) -> (i32, i32) {
    %c0_i32 = arith.constant 0 : i32
    %c0_i32_0 = arith.constant 0 : i32
    %c0_i32_1 = arith.constant 0 : i32
    return %c0_i32, %c0_i32_0 : i32, i32
  }
  func.func @transform_2(%arg0: i32) -> (i32, i32) {
    %c0_i32 = arith.constant 0 : i32
    %c0_i32_0 = arith.constant 0 : i32
    %c0_i32_1 = arith.constant 0 : i32
    return %c0_i32, %c0_i32_0 : i32, i32
  }
  func.func @transform_3(%arg0: i32) -> (i32, i32) {
    %c0_i32 = arith.constant 0 : i32
    %c0_i32_0 = arith.constant 0 : i32
    return %arg0, %c0_i32 : i32, i32
  }
}

module attributes {stable_mosaic.version = 11 : i64} {
  func.func @_actor_kernel(%arg0: i32, %arg1: memref<8x16xbf16, #tpu.memory_space<vmem>>, %arg2: memref<272x128xbf16, #tpu.memory_space<vmem>>, %arg3: memref<3x128xf32, #tpu.memory_space<vmem>>, %arg4: memref<8x8xf32, #tpu.memory_space<vmem>>) attributes {dimension_semantics = [#tpu.dimension_semantics<parallel>], iteration_bounds = array<i64: 1>, scalar_prefetch = 0 : i64, scratch_operands = 0 : i64, tpu.core_type = #tpu.core_type<tc>, window_params = [{transform_indices = @transform_0, window_bounds = array<i64: 8, 16>}, {pipeline_mode = #tpu.pipeline_mode<synchronous>, transform_indices = @transform_1, window_bounds = array<i64: 272, 128>}, {pipeline_mode = #tpu.pipeline_mode<synchronous>, transform_indices = @transform_2, window_bounds = array<i64: 3, 128>}, {transform_indices = @transform_3, window_bounds = array<i64: 8, 8>}]} {
    %c0 = arith.constant 0 : index
    %c0_0 = arith.constant 0 : index
    %0 = vector.load %arg1[%c0, %c0_0] : memref<8x16xbf16, #tpu.memory_space<vmem>>, vector<8x16xbf16>
    %c0_1 = arith.constant 0 : index
    %c0_2 = arith.constant 0 : index
    %1 = vector.load %arg2[%c0_1, %c0_2] : memref<272x128xbf16, #tpu.memory_space<vmem>>, vector<16x128xbf16>
    %c16 = arith.constant 16 : index
    %c0_3 = arith.constant 0 : index
    %2 = vector.load %arg2[%c16, %c0_3] : memref<272x128xbf16, #tpu.memory_space<vmem>>, vector<128x128xbf16>
    %c144 = arith.constant 144 : index
    %c0_4 = arith.constant 0 : index
    %3 = vector.load %arg2[%c144, %c0_4] : memref<272x128xbf16, #tpu.memory_space<vmem>>, vector<128x128xbf16>
    %c0_5 = arith.constant 0 : index
    %c0_6 = arith.constant 0 : index
    %4 = vector.load %arg3[%c0_5, %c0_6] : memref<3x128xf32, #tpu.memory_space<vmem>>, vector<1x128xf32>
    %c1 = arith.constant 1 : index
    %c0_7 = arith.constant 0 : index
    %5 = vector.load %arg3[%c1, %c0_7] : memref<3x128xf32, #tpu.memory_space<vmem>>, vector<1x128xf32>
    %c2 = arith.constant 2 : index
    %c0_8 = arith.constant 0 : index
    %6 = vector.load %arg3[%c2, %c0_8] : memref<3x128xf32, #tpu.memory_space<vmem>>, vector<1x8xf32>
    %cst = arith.constant dense<0.000000e+00> : vector<8x128xf32>
    %7 = tpu.matmul %0, %1, %cst {dimension_numbers = #tpu.dot_dimension_numbers<[1], [0], [0], [1], [0, 0, 1, 1], [], []>} : vector<8x16xbf16>, vector<16x128xbf16>, vector<8x128xf32> -> vector<8x128xf32>
    %8 = vector.broadcast %4 : vector<1x128xf32> to vector<8x128xf32>
    %9 = arith.addf %7, %8 : vector<8x128xf32>
    %cst_9 = arith.constant 0.000000e+00 : f32
    %10 = vector.broadcast %cst_9 : f32 to vector<8x128xf32>
    %11 = arith.maximumf %9, %10 : vector<8x128xf32>
    %12 = arith.truncf %11 : vector<8x128xf32> to vector<8x128xbf16>
    %cst_10 = arith.constant dense<0.000000e+00> : vector<8x128xf32>
    %13 = tpu.matmul %12, %2, %cst_10 {dimension_numbers = #tpu.dot_dimension_numbers<[1], [0], [0], [1], [0, 0, 1, 1], [], []>} : vector<8x128xbf16>, vector<128x128xbf16>, vector<8x128xf32> -> vector<8x128xf32>
    %14 = vector.broadcast %5 : vector<1x128xf32> to vector<8x128xf32>
    %15 = arith.addf %13, %14 : vector<8x128xf32>
    %cst_11 = arith.constant 0.000000e+00 : f32
    %16 = vector.broadcast %cst_11 : f32 to vector<8x128xf32>
    %17 = arith.maximumf %15, %16 : vector<8x128xf32>
    %18 = arith.truncf %17 : vector<8x128xf32> to vector<8x128xbf16>
    %cst_12 = arith.constant dense<0.000000e+00> : vector<8x128xf32>
    %19 = tpu.matmul %18, %3, %cst_12 {dimension_numbers = #tpu.dot_dimension_numbers<[1], [0], [0], [1], [0, 0, 1, 1], [], []>} : vector<8x128xbf16>, vector<128x128xbf16>, vector<8x128xf32> -> vector<8x128xf32>
    %20 = vector.extract_strided_slice %19 {offsets = [0, 0], sizes = [8, 8], strides = [1, 1]} : vector<8x128xf32> to vector<8x8xf32>
    %21 = vector.broadcast %6 : vector<1x8xf32> to vector<8x8xf32>
    %22 = arith.addf %20, %21 : vector<8x8xf32>
    %23 = math.tanh %22 : vector<8x8xf32>
    %cst_13 = arith.constant 2.000000e+00 : f32
    %24 = vector.broadcast %cst_13 : f32 to vector<8x8xf32>
    %25 = arith.mulf %23, %24 : vector<8x8xf32>
    %c0_14 = arith.constant 0 : index
    %c0_15 = arith.constant 0 : index
    %26 = vector.load %arg4[%c0_14, %c0_15] : memref<8x8xf32, #tpu.memory_space<vmem>>, vector<8x8xf32>
    tpu.vector_store %arg4[%c0_14, %c0_15], %25 {strides = array<i32>} : memref<8x8xf32, #tpu.memory_space<vmem>>, vector<8x8xf32>,
    return
  }
  func.func @transform_0(%arg0: i32) -> (i32, i32) {
    %c0_i32 = arith.constant 0 : i32
    %c0_i32_0 = arith.constant 0 : i32
    return %arg0, %c0_i32 : i32, i32
  }
  func.func @transform_1(%arg0: i32) -> (i32, i32) {
    %c0_i32 = arith.constant 0 : i32
    %c0_i32_0 = arith.constant 0 : i32
    %c0_i32_1 = arith.constant 0 : i32
    return %c0_i32, %c0_i32_0 : i32, i32
  }
  func.func @transform_2(%arg0: i32) -> (i32, i32) {
    %c0_i32 = arith.constant 0 : i32
    %c0_i32_0 = arith.constant 0 : i32
    %c0_i32_1 = arith.constant 0 : i32
    return %c0_i32, %c0_i32_0 : i32, i32
  }
  func.func @transform_3(%arg0: i32) -> (i32, i32) {
    %c0_i32 = arith.constant 0 : i32
    %c0_i32_0 = arith.constant 0 : i32
    return %arg0, %c0_i32 : i32, i32
  }
}

</mosaic_0001>

<llo_original>
// kernel: tpu_custom_call.1
$region0: #{tpu_custom_call.1}
  #allocation0 [shape = 'u32[]', space=smem, size = 0x4, offset = 0x4, fixed_abs, tag = 'smem constant byte address 0x4 - core index']
  #allocation1 [shape = 'u32[144,128]{1,0:T(1,128)}', space=vmem, size = 0x12000, scoped, tag = 'internal scratch']
  %s0 = inlined_call_operand.hbm [shape: bf16[8,16], index: 0, kind: input, shape index: {}]
  %s1 = inlined_call_operand.hbm [shape: bf16[272,128], index: 1, kind: input, shape index: {}]
  %s2 = inlined_call_operand.hbm [shape: f32[3,128], index: 2, kind: input, shape index: {}]
  %s3 = inlined_call_operand.hbm [shape: f32[8,8], index: 3, kind: output, shape index: {}]
  %s4 = sld [smem:[#allocation0]]
  $region34: #{tpu_custom_call.1} parent=0
    _
  %s6 = ssub.s32 1, %s4
  %s7 = scalar_select 0, %s6, %s4
  $region1: #{tpu_custom_call.1} parent=0
    #allocation2 [shape = 'u8[2048]{0}', space=vmem, size = 0x800, scoped, tag = 'input window, operand 0, single buffered']
    #allocation3 [shape = 's32[1]{0}', space=sflag, size = 0x4, scoped, tag = 'scoped memory for tpu_custom_call.1']
    #allocation4 [shape = 's32[1]{0}', space=sflag, size = 0x4, scoped, tag = 'scoped memory for tpu_custom_call.1']
    #allocation5 [shape = 'u8[69632]{0}', space=vmem, size = 0x11000, scoped, tag = 'input window, operand 1, single buffered']
    #allocation6 [shape = 's32[1]{0}', space=sflag, size = 0x4, scoped, tag = 'scoped memory for tpu_custom_call.1']
    #allocation7 [shape = 'u8[2048]{0}', space=vmem, size = 0x800, scoped, tag = 'input window, operand 2, single buffered']
    #allocation8 [shape = 'u8[4096]{0}', space=vmem, size = 0x1000, scoped, tag = 'output window, operand 0, single buffered']
    %8 = vsyncpa [#allocation3], 0
    %9 = vsyncpa [#allocation6], 0
    %10 = vsyncpa [#allocation4], 0
    // Predicated region
    $region2: #{tpu_custom_call.1} parent=1 // pred_check
      _
    $region3: #{tpu_custom_call.1} parent=1 // pred_check_branch
      %12 = sbr.rel (0) target = $region5
    $region4: #{tpu_custom_call.1} parent=1 // pred_region
      %s14 = ssub.s32 64, 64
      %15 = vsyncadd [#allocation3], %s14
      %s17 = sshll.u32 [#allocation2], 4
      %s18 = int_to_ptr.vmem [resolvable:$true] %s17
      %20 = dma.hbm_to_vmem [thread:$0]  %s0, 64, %s18, [#allocation3]
    $region5: #{tpu_custom_call.1} parent=1 // pred_fallthru
      _
    // Predicated region
    $region6: #{tpu_custom_call.1} parent=1 // pred_check
      _
    $region7: #{tpu_custom_call.1} parent=1 // pred_check_branch
      %22 = sbr.rel (0) target = $region9
    $region8: #{tpu_custom_call.1} parent=1 // pred_region
      %s24 = ssub.s32 2176, 2176
      %25 = vsyncadd [#allocation6], %s24
      %s26 = sshll.u32 [#allocation5], 4
      %s27 = int_to_ptr.vmem [resolvable:$true] %s26
      %32 = dma.hbm_to_vmem [thread:$0]  %s1, 2176, %s27, [#allocation6], 64, 64, 4
    $region9: #{tpu_custom_call.1} parent=1 // pred_fallthru
      _
    // Predicated region
    $region10: #{tpu_custom_call.1} parent=1 // pred_check
      _
    $region11: #{tpu_custom_call.1} parent=1 // pred_check_branch
      %34 = sbr.rel (0) target = $region13
    $region12: #{tpu_custom_call.1} parent=1 // pred_region
      %s36 = ssub.s32 64, 64
      %37 = vsyncadd [#allocation6], %s36
      %s39 = sshll.u32 [#allocation7], 4
      %s40 = int_to_ptr.vmem [resolvable:$true] %s39
      %42 = dma.hbm_to_vmem [thread:$0]  %s2, 64, %s40, [#allocation6]
    $region13: #{tpu_custom_call.1} parent=1 // pred_fallthru
      _
    // Predicated region
    $region14: #{tpu_custom_call.1} parent=1 // pred_check
      _
    $region15: #{tpu_custom_call.1} parent=1 // pred_check_branch
      %44 = sbr.rel (0) target = $region17
    $region16: #{tpu_custom_call.1} parent=1 // pred_region
      %45 = dma.done [#allocation3], 64
    $region17: #{tpu_custom_call.1} parent=1 // pred_fallthru
      _
    // Predicated region
    $region18: #{tpu_custom_call.1} parent=1 // pred_check
      _
    $region19: #{tpu_custom_call.1} parent=1 // pred_check_branch
      %47 = sbr.rel (0) target = $region21
    $region20: #{tpu_custom_call.1} parent=1 // pred_region
      %48 = dma.done [#allocation6], 2176
    $region21: #{tpu_custom_call.1} parent=1 // pred_fallthru
      _
    // Predicated region
    $region22: #{tpu_custom_call.1} parent=1 // pred_check
      _
    $region23: #{tpu_custom_call.1} parent=1 // pred_check_branch
      %50 = sbr.rel (0) target = $region25
    $region24: #{tpu_custom_call.1} parent=1 // pred_region
      %51 = dma.done [#allocation6], 64
    $region25: #{tpu_custom_call.1} parent=1 // pred_fallthru
      _
    %v53 = vld [vmem:[#allocation2] sm:$0xf]
    %v54 = vld [vmem:[#allocation5] sm:$0xf]
    %v55 = vld [vmem:[#allocation5 + $0x4] sm:$0xf]
    %v56 = vld [vmem:[#allocation5 + $0x8] sm:$0xf]
    %v57 = vld [vmem:[#allocation5 + $0xc] sm:$0xf]
    %v58 = vld [vmem:[#allocation5 + $0x10] sm:$0xf]
    %v59 = vld [vmem:[#allocation5 + $0x14] sm:$0xf]
    %v60 = vld [vmem:[#allocation5 + $0x18] sm:$0xf]
    %v61 = vld [vmem:[#allocation5 + $0x1c] sm:$0xf]
    %v62 = vld [vmem:[#allocation5 + $0x20] sm:$0xf]
    %v63 = vld [vmem:[#allocation5 + $0x24] sm:$0xf]
    %v64 = vld [vmem:[#allocation5 + $0x28] sm:$0xf]
    %v65 = vld [vmem:[#allocation5 + $0x2c] sm:$0xf]
    %v66 = vld [vmem:[#allocation5 + $0x30] sm:$0xf]
    %v67 = vld [vmem:[#allocation5 + $0x34] sm:$0xf]
    %v68 = vld [vmem:[#allocation5 + $0x38] sm:$0xf]
    %v69 = vld [vmem:[#allocation5 + $0x3c] sm:$0xf]
    %v70 = vld [vmem:[#allocation5 + $0x40] sm:$0xf]
    %v71 = vld [vmem:[#allocation5 + $0x44] sm:$0xf]
    %v72 = vld [vmem:[#allocation5 + $0x48] sm:$0xf]
    %v73 = vld [vmem:[#allocation5 + $0x4c] sm:$0xf]
    %v74 = vld [vmem:[#allocation5 + $0x50] sm:$0xf]
    %v75 = vld [vmem:[#allocation5 + $0x54] sm:$0xf]
    %v76 = vld [vmem:[#allocation5 + $0x58] sm:$0xf]
    %v77 = vld [vmem:[#allocation5 + $0x5c] sm:$0xf]
    %v78 = vld [vmem:[#allocation5 + $0x60] sm:$0xf]
    %v79 = vld [vmem:[#allocation5 + $0x64] sm:$0xf]
    %v80 = vld [vmem:[#allocation5 + $0x68] sm:$0xf]
    %v81 = vld [vmem:[#allocation5 + $0x6c] sm:$0xf]
    %v82 = vld [vmem:[#allocation5 + $0x70] sm:$0xf]
    %v83 = vld [vmem:[#allocation5 + $0x74] sm:$0xf]
    %v84 = vld [vmem:[#allocation5 + $0x78] sm:$0xf]
    %v85 = vld [vmem:[#allocation5 + $0x7c] sm:$0xf]
    %v86 = vld [vmem:[#allocation5 + $0x80] sm:$0xf]
    %v87 = vld [vmem:[#allocation5 + $0x84] sm:$0xf]
    %v88 = vld [vmem:[#allocation7] sm:$0x1]
    %v89 = vld [vmem:[#allocation7 + $0x1] sm:$0x1]
    %v90 = vld [vmem:[#allocation7 + $0x2] sm:$0x1]
    %v91 = vlaneseq
    %v92 = vshrl.u32 %v91, 7
    %v93 = vsub.s32 0, %v92
    %v94 = vrot.slane %v88, %v93
    %v97 = vunpack.c.l.b16 %v54
    %v98 = vunpack.c.l.b16 %v55
    %v99 = vpack.c.b16 %v98, %v97
    %vm101 = vcmask 130048
    %v103 = vsel %vm101, %v53, 0
    %105 = vmatprep.subr.bf16.mxu0 0
    %106 = vmatpush1.bf16.msra.mxu0 0
    %107 = vmatprep.subr.bf16.mxu0 0
    %108 = vmatpush1.bf16.msra.mxu0 0
    %109 = vmatprep.subr.bf16.mxu0 0
    %110 = vmatpush1.bf16.msra.mxu0 0
    %111 = vmatprep.subr.bf16.mxu0 0
    %112 = vmatpush1.bf16.msra.mxu0 0
    %113 = vmatprep.subr.bf16.mxu0 0
    %114 = vmatpush1.bf16.msra.mxu0 0
    %115 = vmatprep.subr.bf16.mxu0 0
    %116 = vmatpush1.bf16.msra.mxu0 0
    %117 = vmatprep.subr.bf16.mxu0 0
    %118 = vmatpush1.bf16.msra.mxu0 0
    %119 = vmatprep.subr.bf16.mxu0 0
    %120 = vmatpush1.bf16.msra.mxu0 %v99
    %121 = vmatprep.subr.bf16.mxu0 0
    %122 = vmatpush2.bf16.msra.mxu0 0
    %123 = vmatprep.subr.bf16.mxu0 0
    %124 = vmatpush2.bf16.msra.mxu0 0
    %125 = vmatprep.subr.bf16.mxu0 0
    %126 = vmatpush2.bf16.msra.mxu0 0
    %127 = vmatprep.subr.bf16.mxu0 0
    %128 = vmatpush2.bf16.msra.mxu0 0
    %129 = vmatprep.subr.bf16.mxu0 0
    %130 = vmatpush2.bf16.msra.mxu0 0
    %131 = vmatprep.subr.bf16.mxu0 0
    %132 = vmatpush2.bf16.msra.mxu0 0
    %133 = vmatprep.subr.bf16.mxu0 0
    %134 = vmatpush2.bf16.msra.mxu0 0
    %135 = vmatprep.subr.bf16.mxu0 0
    %136 = vmatpush2.bf16.msra.mxu0 0
    %137 = vmatprep.mubr.bf16.mxu0 0
    %138 = vmatmul.mubr.bf16.gmra.mxu0 %v103
    %v139 = vpop.f32.mrf.mxu0
    %v140 = vadd.f32 %v94, %v139
    %v141 = vpop.f32.mrf.mxu0
    %v142 = vpop.f32.mrf.mxu0
    %v143 = vpop.f32.mrf.mxu0
    %144 = vdwg.mxu0
    %v145 = vmax.f32 %v140, 0.0
    %v146 = vpack.c.bf16 %v145, %v145
    %v147 = vlaneseq
    %v148 = vshrl.u32 %v147, 7
    %v149 = vsub.s32 0, %v148
    %v150 = vrot.slane %v89, %v149
    %v167 = vunpack.c.l.b16 %v56
    %v168 = vunpack.c.l.b16 %v57
    %v169 = vunpack.c.l.b16 %v58
    %v170 = vunpack.c.l.b16 %v59
    %v171 = vunpack.c.l.b16 %v60
    %v172 = vunpack.c.l.b16 %v61
    %v173 = vunpack.c.l.b16 %v62
    %v174 = vunpack.c.l.b16 %v63
    %v175 = vunpack.c.l.b16 %v64
    %v176 = vunpack.c.l.b16 %v65
    %v177 = vunpack.c.l.b16 %v66
    %v178 = vunpack.c.l.b16 %v67
    %v179 = vunpack.c.l.b16 %v68
    %v180 = vunpack.c.l.b16 %v69
    %v181 = vunpack.c.l.b16 %v70
    %v182 = vunpack.c.l.b16 %v71
    %v183 = vpack.c.b16 %v168, %v167
    %v184 = vpack.c.b16 %v170, %v169
    %v185 = vpack.c.b16 %v172, %v171
    %v186 = vpack.c.b16 %v174, %v173
    %v187 = vpack.c.b16 %v176, %v175
    %v188 = vpack.c.b16 %v178, %v177
    %v189 = vpack.c.b16 %v180, %v179
    %v190 = vpack.c.b16 %v182, %v181
    %199 = vmatprep.subr.bf16.mxu0 0
    %200 = vmatpush1.bf16.msra.mxu0 %v190
    %201 = vmatprep.subr.bf16.mxu0 0
    %202 = vmatpush1.bf16.msra.mxu0 %v189
    %203 = vmatprep.subr.bf16.mxu0 0
    %204 = vmatpush1.bf16.msra.mxu0 %v188
    %205 = vmatprep.subr.bf16.mxu0 0
    %206 = vmatpush1.bf16.msra.mxu0 %v187
    %207 = vmatprep.subr.bf16.mxu0 0
    %208 = vmatpush1.bf16.msra.mxu0 %v186
    %209 = vmatprep.subr.bf16.mxu0 0
    %210 = vmatpush1.bf16.msra.mxu0 %v185
    %211 = vmatprep.subr.bf16.mxu0 0
    %212 = vmatpush1.bf16.msra.mxu0 %v184
    %213 = vmatprep.subr.bf16.mxu0 0
    %214 = vmatpush1.bf16.msra.mxu0 %v183
    %215 = vmatprep.subr.bf16.mxu0 0
    %216 = vmatpush2.bf16.msra.mxu0 0
    %217 = vmatprep.subr.bf16.mxu0 0
    %218 = vmatpush2.bf16.msra.mxu0 0
    %219 = vmatprep.subr.bf16.mxu0 0
    %220 = vmatpush2.bf16.msra.mxu0 0
    %221 = vmatprep.subr.bf16.mxu0 0
    %222 = vmatpush2.bf16.msra.mxu0 0
    %223 = vmatprep.subr.bf16.mxu0 0
    %224 = vmatpush2.bf16.msra.mxu0 0
    %225 = vmatprep.subr.bf16.mxu0 0
    %226 = vmatpush2.bf16.msra.mxu0 0
    %227 = vmatprep.subr.bf16.mxu0 0
    %228 = vmatpush2.bf16.msra.mxu0 0
    %229 = vmatprep.subr.bf16.mxu0 0
    %230 = vmatpush2.bf16.msra.mxu0 0
    %231 = vmatprep.mubr.bf16.mxu0 0
    %232 = vmatmul.mubr.bf16.gmra.mxu0 %v146
    %v233 = vpop.f32.mrf.mxu0
    %v234 = vadd.f32 %v150, %v233
    %v235 = vpop.f32.mrf.mxu0
    %v236 = vpop.f32.mrf.mxu0
    %v237 = vpop.f32.mrf.mxu0
    %238 = vdwg.mxu0
    %v239 = vmax.f32 %v234, 0.0
    %v240 = vpack.c.bf16 %v239, %v239
    %v257 = vunpack.c.l.b16 %v72
    %v258 = vunpack.c.l.b16 %v73
    %v259 = vunpack.c.l.b16 %v74
    %v260 = vunpack.c.l.b16 %v75
    %v261 = vunpack.c.l.b16 %v76
    %v262 = vunpack.c.l.b16 %v77
    %v263 = vunpack.c.l.b16 %v78
    %v264 = vunpack.c.l.b16 %v79
    %v265 = vunpack.c.l.b16 %v80
    %v266 = vunpack.c.l.b16 %v81
    %v267 = vunpack.c.l.b16 %v82
    %v268 = vunpack.c.l.b16 %v83
    %v269 = vunpack.c.l.b16 %v84
    %v270 = vunpack.c.l.b16 %v85
    %v271 = vunpack.c.l.b16 %v86
    %v272 = vunpack.c.l.b16 %v87
    %v273 = vpack.c.b16 %v258, %v257
    %v274 = vpack.c.b16 %v260, %v259
    %v275 = vpack.c.b16 %v262, %v261
    %v276 = vpack.c.b16 %v264, %v263
    %v277 = vpack.c.b16 %v266, %v265
    %v278 = vpack.c.b16 %v268, %v267
    %v279 = vpack.c.b16 %v270, %v269
    %v280 = vpack.c.b16 %v272, %v271
    %289 = vmatprep.subr.bf16.mxu0 0
    %290 = vmatpush1.bf16.msra.mxu0 %v280
    %291 = vmatprep.subr.bf16.mxu0 0
    %292 = vmatpush1.bf16.msra.mxu0 %v279
    %293 = vmatprep.subr.bf16.mxu0 0
    %294 = vmatpush1.bf16.msra.mxu0 %v278
    %295 = vmatprep.subr.bf16.mxu0 0
    %296 = vmatpush1.bf16.msra.mxu0 %v277
    %297 = vmatprep.subr.bf16.mxu0 0
    %298 = vmatpush1.bf16.msra.mxu0 %v276
    %299 = vmatprep.subr.bf16.mxu0 0
    %300 = vmatpush1.bf16.msra.mxu0 %v275
    %301 = vmatprep.subr.bf16.mxu0 0
    %302 = vmatpush1.bf16.msra.mxu0 %v274
    %303 = vmatprep.subr.bf16.mxu0 0
    %304 = vmatpush1.bf16.msra.mxu0 %v273
    %305 = vmatprep.subr.bf16.mxu0 0
    %306 = vmatpush2.bf16.msra.mxu0 0
    %307 = vmatprep.subr.bf16.mxu0 0
    %308 = vmatpush2.bf16.msra.mxu0 0
    %309 = vmatprep.subr.bf16.mxu0 0
    %310 = vmatpush2.bf16.msra.mxu0 0
    %311 = vmatprep.subr.bf16.mxu0 0
    %312 = vmatpush2.bf16.msra.mxu0 0
    %313 = vmatprep.subr.bf16.mxu0 0
    %314 = vmatpush2.bf16.msra.mxu0 0
    %315 = vmatprep.subr.bf16.mxu0 0
    %316 = vmatpush2.bf16.msra.mxu0 0
    %317 = vmatprep.subr.bf16.mxu0 0
    %318 = vmatpush2.bf16.msra.mxu0 0
    %319 = vmatprep.subr.bf16.mxu0 0
    %320 = vmatpush2.bf16.msra.mxu0 0
    %321 = vmatprep.mubr.bf16.mxu0 0
    %322 = vmatmul.mubr.bf16.gmra.mxu0 %v240
    %v323 = vpop.f32.mrf.mxu0
    %v324 = vadd.f32 0.0, %v323
    %v325 = vpop.f32.mrf.mxu0
    %v326 = vpop.f32.mrf.mxu0
    %v327 = vpop.f32.mrf.mxu0
    %328 = vdwg.mxu0
    %v329 = vlaneseq
    %v330 = vshrl.u32 %v329, 7
    %v331 = vsub.s32 0, %v330
    %v332 = vrot.slane %v90, %v331
    %v333 = vadd.f32 %v324, %v332
    %v334 = vtanh.pop %v333
    %v335 = vmul.f32 %v334, 2.0
    %vm336 = vcmask 64512
    %337 = vst.msk [vmem:[#allocation8] sm:$0xff] %vm336, %v335
    // Predicated region
    $region26: #{tpu_custom_call.1} parent=1 // pred_check
      _
    $region27: #{tpu_custom_call.1} parent=1 // pred_check_branch
      %339 = sbr.rel (0) target = $region29
    $region28: #{tpu_custom_call.1} parent=1 // pred_region
      %s341 = ssub.s32 128, 128
      %342 = vsyncadd [#allocation4], %s341
      %s344 = sshll.u32 [#allocation8], 4
      %s345 = int_to_ptr.vmem [resolvable:$true] %s344
      %347 = dma.vmem_to_hbm [thread:$0]  %s345, 128, %s3, [#allocation4]
    $region29: #{tpu_custom_call.1} parent=1 // pred_fallthru
      _
    // Predicated region
    $region30: #{tpu_custom_call.1} parent=1 // pred_check
      _
    $region31: #{tpu_custom_call.1} parent=1 // pred_check_branch
      %349 = sbr.rel (0) target = $region33
    $region32: #{tpu_custom_call.1} parent=1 // pred_region
      %350 = dma.done [#allocation4], 128
    $region33: #{tpu_custom_call.1} parent=1 // pred_fallthru
      _
    %351 = vsyncpa [#allocation3], 1
    %352 = vsyncpa [#allocation6], 1
    %353 = vsyncpa [#allocation4], 1

// kernel: tpu_custom_call.1
$region0: #{tpu_custom_call.1}
  #allocation0 [shape = 'u32[]', space=smem, size = 0x4, offset = 0x4, fixed_abs, tag = 'smem constant byte address 0x4 - core index']
  #allocation1 [shape = 'u32[144,128]{1,0:T(1,128)}', space=vmem, size = 0x12000, scoped, tag = 'internal scratch']
  %s0 = inlined_call_operand.hbm [shape: bf16[8,16], index: 0, kind: input, shape index: {}]
  %s1 = inlined_call_operand.hbm [shape: bf16[272,128], index: 1, kind: input, shape index: {}]
  %s2 = inlined_call_operand.hbm [shape: f32[3,128], index: 2, kind: input, shape index: {}]
  %s3 = inlined_call_operand.hbm [shape: f32[8,8], index: 3, kind: output, shape index: {}]
  %s4 = sld [smem:[#allocation0]]
  $region34: #{tpu_custom_call.1} parent=0
    _
  %s6 = ssub.s32 1, %s4
  %s7 = scalar_select 0, %s6, %s4
  $region1: #{tpu_custom_call.1} parent=0
    #allocation2 [shape = 'u8[2048]{0}', space=vmem, size = 0x800, scoped, tag = 'input window, operand 0, single buffered']
    #allocation3 [shape = 's32[1]{0}', space=sflag, size = 0x4, scoped, tag = 'scoped memory for tpu_custom_call.1']
    #allocation4 [shape = 's32[1]{0}', space=sflag, size = 0x4, scoped, tag = 'scoped memory for tpu_custom_call.1']
    #allocation5 [shape = 'u8[69632]{0}', space=vmem, size = 0x11000, scoped, tag = 'input window, operand 1, single buffered']
    #allocation6 [shape = 's32[1]{0}', space=sflag, size = 0x4, scoped, tag = 'scoped memory for tpu_custom_call.1']
    #allocation7 [shape = 'u8[2048]{0}', space=vmem, size = 0x800, scoped, tag = 'input window, operand 2, single buffered']
    #allocation8 [shape = 'u8[4096]{0}', space=vmem, size = 0x1000, scoped, tag = 'output window, operand 0, single buffered']
    %8 = vsyncpa [#allocation3], 0
    %9 = vsyncpa [#allocation6], 0
    %10 = vsyncpa [#allocation4], 0
    // Predicated region
    $region2: #{tpu_custom_call.1} parent=1 // pred_check
      _
    $region3: #{tpu_custom_call.1} parent=1 // pred_check_branch
      %12 = sbr.rel (0) target = $region5
    $region4: #{tpu_custom_call.1} parent=1 // pred_region
      %s14 = ssub.s32 64, 64
      %15 = vsyncadd [#allocation3], %s14
      %s17 = sshll.u32 [#allocation2], 4
      %s18 = int_to_ptr.vmem [resolvable:$true] %s17
      %20 = dma.hbm_to_vmem [thread:$0]  %s0, 64, %s18, [#allocation3]
    $region5: #{tpu_custom_call.1} parent=1 // pred_fallthru
      _
    // Predicated region
    $region6: #{tpu_custom_call.1} parent=1 // pred_check
      _
    $region7: #{tpu_custom_call.1} parent=1 // pred_check_branch
      %22 = sbr.rel (0) target = $region9
    $region8: #{tpu_custom_call.1} parent=1 // pred_region
      %s24 = ssub.s32 2176, 2176
      %25 = vsyncadd [#allocation6], %s24
      %s26 = sshll.u32 [#allocation5], 4
      %s27 = int_to_ptr.vmem [resolvable:$true] %s26
      %32 = dma.hbm_to_vmem [thread:$0]  %s1, 2176, %s27, [#allocation6], 64, 64, 4
    $region9: #{tpu_custom_call.1} parent=1 // pred_fallthru
      _
    // Predicated region
    $region10: #{tpu_custom_call.1} parent=1 // pred_check
      _
    $region11: #{tpu_custom_call.1} parent=1 // pred_check_branch
      %34 = sbr.rel (0) target = $region13
    $region12: #{tpu_custom_call.1} parent=1 // pred_region
      %s36 = ssub.s32 64, 64
      %37 = vsyncadd [#allocation6], %s36
      %s39 = sshll.u32 [#allocation7], 4
      %s40 = int_to_ptr.vmem [resolvable:$true] %s39
      %42 = dma.hbm_to_vmem [thread:$0]  %s2, 64, %s40, [#allocation6]
    $region13: #{tpu_custom_call.1} parent=1 // pred_fallthru
      _
    // Predicated region
    $region14: #{tpu_custom_call.1} parent=1 // pred_check
      _
    $region15: #{tpu_custom_call.1} parent=1 // pred_check_branch
      %44 = sbr.rel (0) target = $region17
    $region16: #{tpu_custom_call.1} parent=1 // pred_region
      %45 = dma.done [#allocation3], 64
    $region17: #{tpu_custom_call.1} parent=1 // pred_fallthru
      _
    // Predicated region
    $region18: #{tpu_custom_call.1} parent=1 // pred_check
      _
    $region19: #{tpu_custom_call.1} parent=1 // pred_check_branch
      %47 = sbr.rel (0) target = $region21
    $region20: #{tpu_custom_call.1} parent=1 // pred_region
      %48 = dma.done [#allocation6], 2176
    $region21: #{tpu_custom_call.1} parent=1 // pred_fallthru
      _
    // Predicated region
    $region22: #{tpu_custom_call.1} parent=1 // pred_check
      _
    $region23: #{tpu_custom_call.1} parent=1 // pred_check_branch
      %50 = sbr.rel (0) target = $region25
    $region24: #{tpu_custom_call.1} parent=1 // pred_region
      %51 = dma.done [#allocation6], 64
    $region25: #{tpu_custom_call.1} parent=1 // pred_fallthru
      _
    %v53 = vld [vmem:[#allocation2] sm:$0xf]
    %v54 = vld [vmem:[#allocation5] sm:$0xf]
    %v55 = vld [vmem:[#allocation5 + $0x4] sm:$0xf]
    %v56 = vld [vmem:[#allocation5 + $0x8] sm:$0xf]
    %v57 = vld [vmem:[#allocation5 + $0xc] sm:$0xf]
    %v58 = vld [vmem:[#allocation5 + $0x10] sm:$0xf]
    %v59 = vld [vmem:[#allocation5 + $0x14] sm:$0xf]
    %v60 = vld [vmem:[#allocation5 + $0x18] sm:$0xf]
    %v61 = vld [vmem:[#allocation5 + $0x1c] sm:$0xf]
    %v62 = vld [vmem:[#allocation5 + $0x20] sm:$0xf]
    %v63 = vld [vmem:[#allocation5 + $0x24] sm:$0xf]
    %v64 = vld [vmem:[#allocation5 + $0x28] sm:$0xf]
    %v65 = vld [vmem:[#allocation5 + $0x2c] sm:$0xf]
    %v66 = vld [vmem:[#allocation5 + $0x30] sm:$0xf]
    %v67 = vld [vmem:[#allocation5 + $0x34] sm:$0xf]
    %v68 = vld [vmem:[#allocation5 + $0x38] sm:$0xf]
    %v69 = vld [vmem:[#allocation5 + $0x3c] sm:$0xf]
    %v70 = vld [vmem:[#allocation5 + $0x40] sm:$0xf]
    %v71 = vld [vmem:[#allocation5 + $0x44] sm:$0xf]
    %v72 = vld [vmem:[#allocation5 + $0x48] sm:$0xf]
    %v73 = vld [vmem:[#allocation5 + $0x4c] sm:$0xf]
    %v74 = vld [vmem:[#allocation5 + $0x50] sm:$0xf]
    %v75 = vld [vmem:[#allocation5 + $0x54] sm:$0xf]
    %v76 = vld [vmem:[#allocation5 + $0x58] sm:$0xf]
    %v77 = vld [vmem:[#allocation5 + $0x5c] sm:$0xf]
    %v78 = vld [vmem:[#allocation5 + $0x60] sm:$0xf]
    %v79 = vld [vmem:[#allocation5 + $0x64] sm:$0xf]
    %v80 = vld [vmem:[#allocation5 + $0x68] sm:$0xf]
    %v81 = vld [vmem:[#allocation5 + $0x6c] sm:$0xf]
    %v82 = vld [vmem:[#allocation5 + $0x70] sm:$0xf]
    %v83 = vld [vmem:[#allocation5 + $0x74] sm:$0xf]
    %v84 = vld [vmem:[#allocation5 + $0x78] sm:$0xf]
    %v85 = vld [vmem:[#allocation5 + $0x7c] sm:$0xf]
    %v86 = vld [vmem:[#allocation5 + $0x80] sm:$0xf]
    %v87 = vld [vmem:[#allocation5 + $0x84] sm:$0xf]
    %v88 = vld [vmem:[#allocation7] sm:$0x1]
    %v89 = vld [vmem:[#allocation7 + $0x1] sm:$0x1]
    %v90 = vld [vmem:[#allocation7 + $0x2] sm:$0x1]
    %v91 = vlaneseq
    %v92 = vshrl.u32 %v91, 7
    %v93 = vsub.s32 0, %v92
    %v94 = vrot.slane %v88, %v93
    %v97 = vunpack.c.l.b16 %v54
    %v98 = vunpack.c.l.b16 %v55
    %v99 = vpack.c.b16 %v98, %v97
    %vm101 = vcmask 130048
    %v103 = vsel %vm101, %v53, 0
    %105 = vmatprep.subr.bf16.mxu0 0
    %106 = vmatpush1.bf16.msra.mxu0 0
    %107 = vmatprep.subr.bf16.mxu0 0
    %108 = vmatpush1.bf16.msra.mxu0 0
    %109 = vmatprep.subr.bf16.mxu0 0
    %110 = vmatpush1.bf16.msra.mxu0 0
    %111 = vmatprep.subr.bf16.mxu0 0
    %112 = vmatpush1.bf16.msra.mxu0 0
    %113 = vmatprep.subr.bf16.mxu0 0
    %114 = vmatpush1.bf16.msra.mxu0 0
    %115 = vmatprep.subr.bf16.mxu0 0
    %116 = vmatpush1.bf16.msra.mxu0 0
    %117 = vmatprep.subr.bf16.mxu0 0
    %118 = vmatpush1.bf16.msra.mxu0 0
    %119 = vmatprep.subr.bf16.mxu0 0
    %120 = vmatpush1.bf16.msra.mxu0 %v99
    %121 = vmatprep.subr.bf16.mxu0 0
    %122 = vmatpush2.bf16.msra.mxu0 0
    %123 = vmatprep.subr.bf16.mxu0 0
    %124 = vmatpush2.bf16.msra.mxu0 0
    %125 = vmatprep.subr.bf16.mxu0 0
    %126 = vmatpush2.bf16.msra.mxu0 0
    %127 = vmatprep.subr.bf16.mxu0 0
    %128 = vmatpush2.bf16.msra.mxu0 0
    %129 = vmatprep.subr.bf16.mxu0 0
    %130 = vmatpush2.bf16.msra.mxu0 0
    %131 = vmatprep.subr.bf16.mxu0 0
    %132 = vmatpush2.bf16.msra.mxu0 0
    %133 = vmatprep.subr.bf16.mxu0 0
    %134 = vmatpush2.bf16.msra.mxu0 0
    %135 = vmatprep.subr.bf16.mxu0 0
    %136 = vmatpush2.bf16.msra.mxu0 0
    %137 = vmatprep.mubr.bf16.mxu0 0
    %138 = vmatmul.mubr.bf16.gmra.mxu0 %v103
    %v139 = vpop.f32.mrf.mxu0
    %v140 = vadd.f32 %v94, %v139
    %v141 = vpop.f32.mrf.mxu0
    %v142 = vpop.f32.mrf.mxu0
    %v143 = vpop.f32.mrf.mxu0
    %144 = vdwg.mxu0
    %v145 = vmax.f32 %v140, 0.0
    %v146 = vpack.c.bf16 %v145, %v145
    %v147 = vlaneseq
    %v148 = vshrl.u32 %v147, 7
    %v149 = vsub.s32 0, %v148
    %v150 = vrot.slane %v89, %v149
    %v167 = vunpack.c.l.b16 %v56
    %v168 = vunpack.c.l.b16 %v57
    %v169 = vunpack.c.l.b16 %v58
    %v170 = vunpack.c.l.b16 %v59
    %v171 = vunpack.c.l.b16 %v60
    %v172 = vunpack.c.l.b16 %v61
    %v173 = vunpack.c.l.b16 %v62
    %v174 = vunpack.c.l.b16 %v63
    %v175 = vunpack.c.l.b16 %v64
    %v176 = vunpack.c.l.b16 %v65
    %v177 = vunpack.c.l.b16 %v66
    %v178 = vunpack.c.l.b16 %v67
    %v179 = vunpack.c.l.b16 %v68
    %v180 = vunpack.c.l.b16 %v69
    %v181 = vunpack.c.l.b16 %v70
    %v182 = vunpack.c.l.b16 %v71
    %v183 = vpack.c.b16 %v168, %v167
    %v184 = vpack.c.b16 %v170, %v169
    %v185 = vpack.c.b16 %v172, %v171
    %v186 = vpack.c.b16 %v174, %v173
    %v187 = vpack.c.b16 %v176, %v175
    %v188 = vpack.c.b16 %v178, %v177
    %v189 = vpack.c.b16 %v180, %v179
    %v190 = vpack.c.b16 %v182, %v181
    %199 = vmatprep.subr.bf16.mxu0 0
    %200 = vmatpush1.bf16.msra.mxu0 %v190
    %201 = vmatprep.subr.bf16.mxu0 0
    %202 = vmatpush1.bf16.msra.mxu0 %v189
    %203 = vmatprep.subr.bf16.mxu0 0
    %204 = vmatpush1.bf16.msra.mxu0 %v188
    %205 = vmatprep.subr.bf16.mxu0 0
    %206 = vmatpush1.bf16.msra.mxu0 %v187
    %207 = vmatprep.subr.bf16.mxu0 0
    %208 = vmatpush1.bf16.msra.mxu0 %v186
    %209 = vmatprep.subr.bf16.mxu0 0
    %210 = vmatpush1.bf16.msra.mxu0 %v185
    %211 = vmatprep.subr.bf16.mxu0 0
    %212 = vmatpush1.bf16.msra.mxu0 %v184
    %213 = vmatprep.subr.bf16.mxu0 0
    %214 = vmatpush1.bf16.msra.mxu0 %v183
    %215 = vmatprep.subr.bf16.mxu0 0
    %216 = vmatpush2.bf16.msra.mxu0 0
    %217 = vmatprep.subr.bf16.mxu0 0
    %218 = vmatpush2.bf16.msra.mxu0 0
    %219 = vmatprep.subr.bf16.mxu0 0
    %220 = vmatpush2.bf16.msra.mxu0 0
    %221 = vmatprep.subr.bf16.mxu0 0
    %222 = vmatpush2.bf16.msra.mxu0 0
    %223 = vmatprep.subr.bf16.mxu0 0
    %224 = vmatpush2.bf16.msra.mxu0 0
    %225 = vmatprep.subr.bf16.mxu0 0
    %226 = vmatpush2.bf16.msra.mxu0 0
    %227 = vmatprep.subr.bf16.mxu0 0
    %228 = vmatpush2.bf16.msra.mxu0 0
    %229 = vmatprep.subr.bf16.mxu0 0
    %230 = vmatpush2.bf16.msra.mxu0 0
    %231 = vmatprep.mubr.bf16.mxu0 0
    %232 = vmatmul.mubr.bf16.gmra.mxu0 %v146
    %v233 = vpop.f32.mrf.mxu0
    %v234 = vadd.f32 %v150, %v233
    %v235 = vpop.f32.mrf.mxu0
    %v236 = vpop.f32.mrf.mxu0
    %v237 = vpop.f32.mrf.mxu0
    %238 = vdwg.mxu0
    %v239 = vmax.f32 %v234, 0.0
    %v240 = vpack.c.bf16 %v239, %v239
    %v257 = vunpack.c.l.b16 %v72
    %v258 = vunpack.c.l.b16 %v73
    %v259 = vunpack.c.l.b16 %v74
    %v260 = vunpack.c.l.b16 %v75
    %v261 = vunpack.c.l.b16 %v76
    %v262 = vunpack.c.l.b16 %v77
    %v263 = vunpack.c.l.b16 %v78
    %v264 = vunpack.c.l.b16 %v79
    %v265 = vunpack.c.l.b16 %v80
    %v266 = vunpack.c.l.b16 %v81
    %v267 = vunpack.c.l.b16 %v82
    %v268 = vunpack.c.l.b16 %v83
    %v269 = vunpack.c.l.b16 %v84
    %v270 = vunpack.c.l.b16 %v85
    %v271 = vunpack.c.l.b16 %v86
    %v272 = vunpack.c.l.b16 %v87
    %v273 = vpack.c.b16 %v258, %v257
    %v274 = vpack.c.b16 %v260, %v259
    %v275 = vpack.c.b16 %v262, %v261
    %v276 = vpack.c.b16 %v264, %v263
    %v277 = vpack.c.b16 %v266, %v265
    %v278 = vpack.c.b16 %v268, %v267
    %v279 = vpack.c.b16 %v270, %v269
    %v280 = vpack.c.b16 %v272, %v271
    %289 = vmatprep.subr.bf16.mxu0 0
    %290 = vmatpush1.bf16.msra.mxu0 %v280
    %291 = vmatprep.subr.bf16.mxu0 0
    %292 = vmatpush1.bf16.msra.mxu0 %v279
    %293 = vmatprep.subr.bf16.mxu0 0
    %294 = vmatpush1.bf16.msra.mxu0 %v278
    %295 = vmatprep.subr.bf16.mxu0 0
    %296 = vmatpush1.bf16.msra.mxu0 %v277
    %297 = vmatprep.subr.bf16.mxu0 0
    %298 = vmatpush1.bf16.msra.mxu0 %v276
    %299 = vmatprep.subr.bf16.mxu0 0
    %300 = vmatpush1.bf16.msra.mxu0 %v275
    %301 = vmatprep.subr.bf16.mxu0 0
    %302 = vmatpush1.bf16.msra.mxu0 %v274
    %303 = vmatprep.subr.bf16.mxu0 0
    %304 = vmatpush1.bf16.msra.mxu0 %v273
    %305 = vmatprep.subr.bf16.mxu0 0
    %306 = vmatpush2.bf16.msra.mxu0 0
    %307 = vmatprep.subr.bf16.mxu0 0
    %308 = vmatpush2.bf16.msra.mxu0 0
    %309 = vmatprep.subr.bf16.mxu0 0
    %310 = vmatpush2.bf16.msra.mxu0 0
    %311 = vmatprep.subr.bf16.mxu0 0
    %312 = vmatpush2.bf16.msra.mxu0 0
    %313 = vmatprep.subr.bf16.mxu0 0
    %314 = vmatpush2.bf16.msra.mxu0 0
    %315 = vmatprep.subr.bf16.mxu0 0
    %316 = vmatpush2.bf16.msra.mxu0 0
    %317 = vmatprep.subr.bf16.mxu0 0
    %318 = vmatpush2.bf16.msra.mxu0 0
    %319 = vmatprep.subr.bf16.mxu0 0
    %320 = vmatpush2.bf16.msra.mxu0 0
    %321 = vmatprep.mubr.bf16.mxu0 0
    %322 = vmatmul.mubr.bf16.gmra.mxu0 %v240
    %v323 = vpop.f32.mrf.mxu0
    %v324 = vadd.f32 0.0, %v323
    %v325 = vpop.f32.mrf.mxu0
    %v326 = vpop.f32.mrf.mxu0
    %v327 = vpop.f32.mrf.mxu0
    %328 = vdwg.mxu0
    %v329 = vlaneseq
    %v330 = vshrl.u32 %v329, 7
    %v331 = vsub.s32 0, %v330
    %v332 = vrot.slane %v90, %v331
    %v333 = vadd.f32 %v324, %v332
    %v334 = vtanh.pop %v333
    %v335 = vmul.f32 %v334, 2.0
    %vm336 = vcmask 64512
    %337 = vst.msk [vmem:[#allocation8] sm:$0xff] %vm336, %v335
    // Predicated region
    $region26: #{tpu_custom_call.1} parent=1 // pred_check
      _
    $region27: #{tpu_custom_call.1} parent=1 // pred_check_branch
      %339 = sbr.rel (0) target = $region29
    $region28: #{tpu_custom_call.1} parent=1 // pred_region
      %s341 = ssub.s32 128, 128
      %342 = vsyncadd [#allocation4], %s341
      %s344 = sshll.u32 [#allocation8], 4
      %s345 = int_to_ptr.vmem [resolvable:$true] %s344
      %347 = dma.vmem_to_hbm [thread:$0]  %s345, 128, %s3, [#allocation4]
    $region29: #{tpu_custom_call.1} parent=1 // pred_fallthru
      _
    // Predicated region
    $region30: #{tpu_custom_call.1} parent=1 // pred_check
      _
    $region31: #{tpu_custom_call.1} parent=1 // pred_check_branch
      %349 = sbr.rel (0) target = $region33
    $region32: #{tpu_custom_call.1} parent=1 // pred_region
      %350 = dma.done [#allocation4], 128
    $region33: #{tpu_custom_call.1} parent=1 // pred_fallthru
      _
    %351 = vsyncpa [#allocation3], 1
    %352 = vsyncpa [#allocation6], 1
    %353 = vsyncpa [#allocation4], 1

</llo_original>
